<compile_context>
chip_gen: v7x
topology: tpu7x:2x2x1
jax: 0.10.0
libtpu: 0.0.40
codegen_flags: <defaults>
</compile_context>

<pallas_src>
import functools
import math

import jax
import jax.numpy as jnp
import numpy as np
from jax import lax
from jax.experimental import pallas as pl
from jax.experimental.pallas import tpu as pltpu

_SQRT1_2 = 1.0 / math.sqrt(2.0)
_LANE = 128


def _round_up(x, m):
    return (x + m - 1) // m * m


def _gelu_exact(y):
    # torch.nn.GELU() default (approximate='none')
    return 0.5 * y * (1.0 + lax.erf(y * _SQRT1_2))


def _fold_bn(gamma, beta, mean, var, eps, c_pad):
    """Fold eval-mode BatchNorm into (scale, bias), zero-padded to the lane boundary."""
    scale = gamma / jnp.sqrt(var + eps)
    bias = beta - mean * scale
    c = gamma.shape[0]
    scale = jnp.pad(scale, (0, c_pad - c)).reshape(1, c_pad).astype(jnp.float32)
    bias = jnp.pad(bias, (0, c_pad - c)).reshape(1, c_pad).astype(jnp.float32)
    return scale, bias


# ---------------------------------------------------------------------------
# 1x1 conv + BN (+ GELU) (+ residual)  ==  lane-dense tiled GEMM
# ---------------------------------------------------------------------------
def _pointwise_kernel(*refs, act, fuse_residual):
    if fuse_residual:
        x_ref, w_ref, scale_ref, bias_ref, res_ref, o_ref = refs
    else:
        x_ref, w_ref, scale_ref, bias_ref, o_ref = refs
        res_ref = None
    # bf16 MXU inputs, f32 accumulation; BN + GELU epilogue in f32.
    y = jnp.dot(x_ref[...].astype(jnp.bfloat16),
                w_ref[...].astype(jnp.bfloat16),
                preferred_element_type=jnp.float32)
    y = y * scale_ref[...] + bias_ref[...]
    if act:
        y = _gelu_exact(y)
    if fuse_residual:
        y = y + res_ref[...].astype(jnp.float32)
    o_ref[...] = y.astype(o_ref.dtype)


def _pointwise_conv_bn(x_flat, w, scale, bias, *, act, residual=None,
                       out_dtype=jnp.float32, tm=512):
    """x_flat: (M, Cin_pad); w: (Cin_pad, Cout_pad) bf16; scale/bias: (1, Cout_pad) f32.
       residual: optional (M, Cout_pad).  Returns (M, Cout_pad) in out_dtype."""
    M, cin = x_flat.shape
    cout = w.shape[1]
    tn = 256 if cout % 256 == 0 else 128
    m_pad = _round_up(M, tm)
    if m_pad != M:
        x_flat = jnp.pad(x_flat, ((0, m_pad - M), (0, 0)))
        if residual is not None:
            residual = jnp.pad(residual, ((0, m_pad - M), (0, 0)))

    in_specs = [
        pl.BlockSpec((tm, cin), lambda i, j: (i, 0)),
        pl.BlockSpec((cin, tn), lambda i, j: (0, j)),
        pl.BlockSpec((1, tn), lambda i, j: (0, j)),
        pl.BlockSpec((1, tn), lambda i, j: (0, j)),
    ]
    args = [x_flat, w, scale, bias]
    if residual is not None:
        in_specs.append(pl.BlockSpec((tm, tn), lambda i, j: (i, j)))
        args.append(residual)

    kernel = functools.partial(_pointwise_kernel, act=act,
                               fuse_residual=residual is not None)
    out = pl.pallas_call(
        kernel,
        out_shape=jax.ShapeDtypeStruct((m_pad, cout), out_dtype),
        grid=(m_pad // tm, cout // tn),
        in_specs=in_specs,
        out_specs=pl.BlockSpec((tm, tn), lambda i, j: (i, j)),
        compiler_params=pltpu.CompilerParams(
            dimension_semantics=("parallel", "parallel")),
    )(*args)
    return out[:M]


# ---------------------------------------------------------------------------
# depthwise KxK conv (stride S) + BN + GELU
# ---------------------------------------------------------------------------
def _dw_conv_bn_gelu_kernel(x_ref, w_ref, scale_ref, bias_ref, o_ref, *, K, S, Ho, Wo):
    """x_ref: (S*S, 1, Hq, Wq, tc) phase-split padded input for one image / channel tile.
       w_ref: (K*K, tc);  scale/bias: (1, tc);  o_ref: (1, Ho, Wo, tc)."""
    tc = o_ref.shape[-1]
    acc = jnp.zeros((Ho, Wo, tc), jnp.float32)
    for kh in range(K):
        for kw in range(K):
            ph = (kh % S) * S + (kw % S)
            r0, c0 = kh // S, kw // S
            patch = x_ref[ph, 0, r0:r0 + Ho, c0:c0 + Wo, :]           # plain window load
            w_tap = w_ref[kh * K + kw:kh * K + kw + 1, :].reshape(1, 1, tc)
            acc = acc + patch.astype(jnp.float32) * w_tap
    y = acc * scale_ref[...].reshape(1, 1, tc) + bias_ref[...].reshape(1, 1, tc)
    y = _gelu_exact(y)
    o_ref[0] = y.astype(o_ref.dtype)


def _depthwise_conv_bn_gelu(x_nhwc, w_dw, scale, bias, *, K, S, P,
                            out_dtype=jnp.bfloat16):
    """x_nhwc: (N, H, W, C_pad) f32; w_dw: (K*K, C_pad) f32.  Returns (N, Ho, Wo, C_pad)."""
    N, H, W, C = x_nhwc.shape
    Hp, Wp = H + 2 * P, W + 2 * P
    Ho = (Hp - K) // S + 1
    Wo = (Wp - K) // S + 1
    # TODO(synk): fold the spatial zero-padding / phase split into the kernel via manual halo
    # DMA with output-row tiling instead of wrapper-side jnp.pad + stack.
    Hp2, Wp2 = _round_up(Hp, S), _round_up(Wp, S)
    xp = jnp.pad(x_nhwc, ((0, 0), (P, P + Hp2 - Hp), (P, P + Wp2 - Wp), (0, 0)))
    # De-interleave into S*S phases so the stride-S conv needs only unstrided window loads.
    xq = jnp.stack([xp[:, i::S, j::S, :] for i in range(S) for j in range(S)], axis=0)
    Hq, Wq = Hp2 // S, Wp2 // S
    tc = _LANE

    kernel = functools.partial(_dw_conv_bn_gelu_kernel, K=K, S=S, Ho=Ho, Wo=Wo)
    return pl.pallas_call(
        kernel,
        out_shape=jax.ShapeDtypeStruct((N, Ho, Wo, C), out_dtype),
        grid=(N, C // tc),
        in_specs=[
            pl.BlockSpec((S * S, 1, Hq, Wq, tc), lambda n, c: (0, n, 0, 0, c)),
            pl.BlockSpec((K * K, tc), lambda n, c: (0, c)),
            pl.BlockSpec((1, tc), lambda n, c: (0, c)),
            pl.BlockSpec((1, tc), lambda n, c: (0, c)),
        ],
        out_specs=pl.BlockSpec((1, Ho, Wo, tc), lambda n, c: (n, 0, 0, c)),
        compiler_params=pltpu.CompilerParams(
            dimension_semantics=("parallel", "parallel")),
    )(xq, w_dw, scale, bias)


# ---------------------------------------------------------------------------
# Full InvResConv forward (inference semantics: BN uses running stats)
# ---------------------------------------------------------------------------
def inv_res_conv_forward(x_nchw, params, *, inp, oup, stride, expansion, eps=1e-5):
    assert stride in (1, 2)
    hidden = int(inp * expansion)
    use_res = (stride == 1 and inp == oup)
    N, C, H, W = x_nchw.shape
    assert C == inp

    cin_pad = _round_up(inp, _LANE)
    hid_pad = _round_up(hidden, _LANE)
    out_pad = _round_up(oup, _LANE)

    # Single NCHW->NHWC layout transform for the whole block; channels zero-padded so all
    # kernel outputs are lane-dense.  TODO(synk): accept NHWC directly to drop this pass.
    x_nhwc = jnp.transpose(x_nchw, (0, 2, 3, 1)).astype(jnp.float32)
    x_nhwc = jnp.pad(x_nhwc, ((0, 0), (0, 0), (0, 0), (0, cin_pad - inp)))
    x_flat = x_nhwc.reshape(N * H * W, cin_pad)

    if expansion != 1:
        # stage 1: 1x1 expand + BN + GELU
        w1 = params['pw1_w'].reshape(hidden, inp).T                       # (inp, hidden)
        w1 = jnp.pad(w1, ((0, cin_pad - inp), (0, hid_pad - hidden))).astype(jnp.bfloat16)
        s1, b1 = _fold_bn(*params['pw1_bn'], eps, hid_pad)
        h1 = _pointwise_conv_bn(x_flat, w1, s1, b1, act=True, out_dtype=jnp.float32)
        h1 = h1.reshape(N, H, W, hid_pad)
    else:
        assert hidden == inp
        h1 = x_nhwc                                                       # hid_pad == cin_pad

    # stage 2: depthwise 3x3 (stride) + BN + GELU
    wd = params['dw_w'].reshape(hidden, 9).T                              # (9, hidden)
    wd = jnp.pad(wd, ((0, 0), (0, hid_pad - hidden))).astype(jnp.float32)
    sd, bd = _fold_bn(*params['dw_bn'], eps, hid_pad)
    h2 = _depthwise_conv_bn_gelu(h1, wd, sd, bd, K=3, S=stride, P=1,
                                 out_dtype=jnp.bfloat16)
    _, Ho, Wo, _ = h2.shape

    # stage 3: 1x1 project + BN (no activation), residual fused when applicable
    w2 = params['pw2_w'].reshape(oup, hidden).T                           # (hidden, oup)
    w2 = jnp.pad(w2, ((0, hid_pad - hidden), (0, out_pad - oup))).astype(jnp.bfloat16)
    s2, b2 = _fold_bn(*params['pw2_bn'], eps, out_pad)
    h2_flat = h2.reshape(N * Ho * Wo, hid_pad)
    residual = x_flat if use_res else None
    y = _pointwise_conv_bn(h2_flat, w2, s2, b2, act=False, residual=residual,
                           out_dtype=jnp.float32)
    y = y.reshape(N, Ho, Wo, out_pad)[..., :oup]
    return jnp.transpose(y, (0, 3, 1, 2))                                 # NHWC -> NCHW


# ---------------------------------------------------------------------------
# Plain-JAX reference + demo
# ---------------------------------------------------------------------------
def _bn_ref(y, gamma, beta, mean, var, eps=1e-5):
    inv = 1.0 / jnp.sqrt(var + eps)
    return ((y - mean[None, :, None, None]) * inv[None, :, None, None]
            * gamma[None, :, None, None] + beta[None, :, None, None])


def inv_res_conv_reference(x, params, *, inp, oup, stride, expansion, eps=1e-5):
    hidden = int(inp * expansion)
    use_res = (stride == 1 and inp == oup)
    h = x
    if expansion != 1:
        h = lax.conv_general_dilated(h, params['pw1_w'], (1, 1), [(0, 0), (0, 0)],
                                     dimension_numbers=("NCHW", "OIHW", "NCHW"))
        h = jax.nn.gelu(_bn_ref(h, *params['pw1_bn'], eps), approximate=False)
    h = lax.conv_general_dilated(h, params['dw_w'], (stride, stride), [(1, 1), (1, 1)],
                                 dimension_numbers=("NCHW", "OIHW", "NCHW"),
                                 feature_group_count=hidden)
    h = jax.nn.gelu(_bn_ref(h, *params['dw_bn'], eps), approximate=False)
    h = lax.conv_general_dilated(h, params['pw2_w'], (1, 1), [(0, 0), (0, 0)],
                                 dimension_numbers=("NCHW", "OIHW", "NCHW"))
    h = _bn_ref(h, *params['pw2_bn'], eps)
    return x + h if use_res else h


def make_params(key, inp, oup, expansion):
    hidden = int(inp * expansion)
    ks = list(jax.random.split(key, 18))
    take = ks.pop

    def bn_stats(c):
        return (1.0 + 0.1 * jax.random.normal(take(), (c,), jnp.float32),
                0.1 * jax.random.normal(take(), (c,), jnp.float32),
                0.1 * jax.random.normal(take(), (c,), jnp.float32),
                jnp.abs(jax.random.normal(take(), (c,), jnp.float32)) + 0.5)

    p = {}
    if expansion != 1:
        p['pw1_w'] = 0.3 * jax.random.normal(take(), (hidden, inp, 1, 1), jnp.float32)
        p['pw1_bn'] = bn_stats(hidden)
    p['dw_w'] = 0.3 * jax.random.normal(take(), (hidden, 1, 3, 3), jnp.float32)
    p['dw_bn'] = bn_stats(hidden)
    p['pw2_w'] = 0.3 * jax.random.normal(take(), (oup, hidden, 1, 1), jnp.float32)
    p['pw2_bn'] = bn_stats(oup)
    return p


if __name__ == "__main__":
    key = jax.random.PRNGKey(0)
    kx, kp1, kp2, kp3 = jax.random.split(key, 4)
    x = jax.random.normal(kx, (2, 4, 16, 16), dtype=jnp.float32)

    configs = [
        dict(inp=4, oup=4, stride=1, expansion=4),   # expand + dw(s=1) + project, residual
        dict(inp=4, oup=8, stride=2, expansion=4),   # stride-2 downsample, no residual
        dict(inp=4, oup=4, stride=1, expansion=1),   # expansion==1 path (depthwise first)
    ]
    for cfg, kp in zip(configs, (kp1, kp2, kp3)):
        params = make_params(kp, cfg['inp'], cfg['oup'], cfg['expansion'])
        out = jax.block_until_ready(inv_res_conv_forward(x, params, **cfg))
        ref = inv_res_conv_reference(x, params, **cfg)
        np.testing.assert_allclose(np.asarray(out), np.asarray(ref), rtol=2e-2, atol=2e-2)

    print("KERNEL_OK")
</pallas_src>

<mosaic_0001>
module attributes {stable_mosaic.version = 11 : i64} {
  func.func @_pointwise_kernel(%arg0: i32, %arg1: i32, %arg2: memref<512x128xf32, #tpu.memory_space<vmem>>, %arg3: memref<128x128xbf16, #tpu.memory_space<vmem>>, %arg4: memref<1x128xf32, #tpu.memory_space<vmem>>, %arg5: memref<1x128xf32, #tpu.memory_space<vmem>>, %arg6: memref<512x128xf32, #tpu.memory_space<vmem>>) attributes {dimension_semantics = [#tpu.dimension_semantics<parallel>, #tpu.dimension_semantics<parallel>], iteration_bounds = array<i64: 1, 1>, scalar_prefetch = 0 : i64, scratch_operands = 0 : i64, tpu.core_type = #tpu.core_type<tc>, window_params = [{transform_indices = @transform_0, window_bounds = array<i64: 512, 128>}, {transform_indices = @transform_1, window_bounds = array<i64: 128, 128>}, {transform_indices = @transform_2, window_bounds = array<i64: 1, 128>}, {transform_indices = @transform_3, window_bounds = array<i64: 1, 128>}, {transform_indices = @transform_4, window_bounds = array<i64: 512, 128>}]} {
    %c0 = arith.constant 0 : index
    %c0_0 = arith.constant 0 : index
    %0 = vector.load %arg2[%c0, %c0_0] : memref<512x128xf32, #tpu.memory_space<vmem>>, vector<512x128xf32>
    %1 = arith.truncf %0 : vector<512x128xf32> to vector<512x128xbf16>
    %c0_1 = arith.constant 0 : index
    %c0_2 = arith.constant 0 : index
    %2 = vector.load %arg3[%c0_1, %c0_2] : memref<128x128xbf16, #tpu.memory_space<vmem>>, vector<128x128xbf16>
    %cst = arith.constant dense<0.000000e+00> : vector<512x128xf32>
    %3 = tpu.matmul %1, %2, %cst {dimension_numbers = #tpu.dot_dimension_numbers<[1], [0], [0], [1], [0, 0, 1, 1], [], []>} : vector<512x128xbf16>, vector<128x128xbf16>, vector<512x128xf32> -> vector<512x128xf32>
    %c0_3 = arith.constant 0 : index
    %c0_4 = arith.constant 0 : index
    %4 = vector.load %arg4[%c0_3, %c0_4] : memref<1x128xf32, #tpu.memory_space<vmem>>, vector<1x128xf32>
    %5 = vector.broadcast %4 : vector<1x128xf32> to vector<512x128xf32>
    %6 = arith.mulf %3, %5 : vector<512x128xf32>
    %c0_5 = arith.constant 0 : index
    %c0_6 = arith.constant 0 : index
    %7 = vector.load %arg5[%c0_5, %c0_6] : memref<1x128xf32, #tpu.memory_space<vmem>>, vector<1x128xf32>
    %8 = vector.broadcast %7 : vector<1x128xf32> to vector<512x128xf32>
    %9 = arith.addf %6, %8 : vector<512x128xf32>
    %cst_7 = arith.constant 5.000000e-01 : f32
    %10 = vector.broadcast %cst_7 : f32 to vector<512x128xf32>
    %11 = arith.mulf %10, %9 : vector<512x128xf32>
    %cst_8 = arith.constant 0.707106769 : f32
    %12 = vector.broadcast %cst_8 : f32 to vector<512x128xf32>
    %13 = arith.mulf %9, %12 : vector<512x128xf32>
    %14 = math.erf %13 : vector<512x128xf32>
    %cst_9 = arith.constant 1.000000e+00 : f32
    %15 = vector.broadcast %cst_9 : f32 to vector<512x128xf32>
    %16 = arith.addf %15, %14 : vector<512x128xf32>
    %17 = arith.mulf %11, %16 : vector<512x128xf32>
    %c0_10 = arith.constant 0 : index
    %c0_11 = arith.constant 0 : index
    %18 = vector.load %arg6[%c0_10, %c0_11] : memref<512x128xf32, #tpu.memory_space<vmem>>, vector<512x128xf32>
    tpu.vector_store %arg6[%c0_10, %c0_11], %17 {strides = array<i32>} : memref<512x128xf32, #tpu.memory_space<vmem>>, vector<512x128xf32>,
    return
  }
  func.func @transform_0(%arg0: i32, %arg1: i32) -> (i32, i32) {
    %c0_i32 = arith.constant 0 : i32
    %c0_i32_0 = arith.constant 0 : i32
    return %arg0, %c0_i32 : i32, i32
  }
  func.func @transform_1(%arg0: i32, %arg1: i32) -> (i32, i32) {
    %c0_i32 = arith.constant 0 : i32
    %c0_i32_0 = arith.constant 0 : i32
    return %c0_i32, %arg1 : i32, i32
  }
  func.func @transform_2(%arg0: i32, %arg1: i32) -> (i32, i32) {
    %c0_i32 = arith.constant 0 : i32
    %c0_i32_0 = arith.constant 0 : i32
    return %c0_i32, %arg1 : i32, i32
  }
  func.func @transform_3(%arg0: i32, %arg1: i32) -> (i32, i32) {
    %c0_i32 = arith.constant 0 : i32
    %c0_i32_0 = arith.constant 0 : i32
    return %c0_i32, %arg1 : i32, i32
  }
  func.func @transform_4(%arg0: i32, %arg1: i32) -> (i32, i32) {
    %c0_i32 = arith.constant 0 : i32
    return %arg0, %arg1 : i32, i32
  }
}

</mosaic_0001>

<llo_original>
// kernel: tpu_custom_call.1
$region0: #{tpu_custom_call.1}
  #allocation0 [shape = 'u32[]', space=smem, size = 0x4, offset = 0x4, fixed_abs, tag = 'smem constant byte address 0x4 - core index']
  #allocation1 [shape = 'u32[144,128]{1,0:T(1,128)}', space=vmem, size = 0x12000, scoped, tag = 'internal scratch']
  %s0 = inlined_call_operand.hbm [shape: f32[512,128], index: 0, kind: input, shape index: {}]
  %s1 = inlined_call_operand.hbm [shape: bf16[128,128], index: 1, kind: input, shape index: {}]
  %s2 = inlined_call_operand.vmem [shape: f32[1,128], index: 2, kind: input, shape index: {}]
  %s3 = inlined_call_operand.vmem [shape: f32[1,128], index: 3, kind: input, shape index: {}]
  %s4 = inlined_call_operand.hbm [shape: f32[512,128], index: 4, kind: output, shape index: {}]
  %s5 = sld [smem:[#allocation0]]
  $region34: #{tpu_custom_call.1} parent=0
    _
  %s7 = ssub.s32 1, %s5
  %s8 = scalar_select 0, %s7, %s5
  $region1: #{tpu_custom_call.1} parent=0
    #allocation2 [shape = 'u8[262144]{0}', space=vmem, size = 0x40000, scoped, tag = 'input window, operand 0, single buffered']
    #allocation3 [shape = 's32[1]{0}', space=sflag, size = 0x4, scoped, tag = 'scoped memory for tpu_custom_call.1']
    #allocation4 [shape = 's32[1]{0}', space=sflag, size = 0x4, scoped, tag = 'scoped memory for tpu_custom_call.1']
    #allocation5 [shape = 'u8[32768]{0}', space=vmem, size = 0x8000, scoped, tag = 'input window, operand 1, single buffered']
    #allocation6 [shape = 's32[1]{0}', space=sflag, size = 0x4, scoped, tag = 'scoped memory for tpu_custom_call.1']
    #allocation7 [shape = 'u8[262144]{0}', space=vmem, size = 0x40000, scoped, tag = 'output window, operand 0, single buffered']
    %9 = vsyncpa [#allocation3], 0
    %10 = vsyncpa [#allocation6], 0
    %11 = vsyncpa [#allocation4], 0
    // Predicated region
    $region2: #{tpu_custom_call.1} parent=1 // pred_check
      _
    $region3: #{tpu_custom_call.1} parent=1 // pred_check_branch
      %13 = sbr.rel (0) target = $region5
    $region4: #{tpu_custom_call.1} parent=1 // pred_region
      %s15 = ssub.s32 8192, 8192
      %16 = vsyncadd [#allocation3], %s15
      %s17 = sshll.u32 [#allocation2], 4
      %s18 = int_to_ptr.vmem [resolvable:$true] %s17
      %23 = dma.hbm_to_vmem [thread:$0]  %s0, 8192, %s18, [#allocation3], 128, 128, 8
    $region5: #{tpu_custom_call.1} parent=1 // pred_fallthru
      _
    // Predicated region
    $region6: #{tpu_custom_call.1} parent=1 // pred_check
      _
    $region7: #{tpu_custom_call.1} parent=1 // pred_check_branch
      %25 = sbr.rel (0) target = $region9
    $region8: #{tpu_custom_call.1} parent=1 // pred_region
      %s27 = ssub.s32 1024, 1024
      %28 = vsyncadd [#allocation6], %s27
      %s29 = sshll.u32 [#allocation5], 4
      %s30 = int_to_ptr.vmem [resolvable:$true] %s29
      %35 = dma.hbm_to_vmem [thread:$0]  %s1, 1024, %s30, [#allocation6], 64, 64, 4
    $region9: #{tpu_custom_call.1} parent=1 // pred_fallthru
      _
    // Predicated region
    $region10: #{tpu_custom_call.1} parent=1 // pred_check
      _
    $region11: #{tpu_custom_call.1} parent=1 // pred_check_branch
      %37 = sbr.rel (0) target = $region13
    $region12: #{tpu_custom_call.1} parent=1 // pred_region
      _
    $region13: #{tpu_custom_call.1} parent=1 // pred_fallthru
      _
    // Predicated region
    $region14: #{tpu_custom_call.1} parent=1 // pred_check
      _
    $region15: #{tpu_custom_call.1} parent=1 // pred_check_branch
      %39 = sbr.rel (0) target = $region17
    $region16: #{tpu_custom_call.1} parent=1 // pred_region
      _
    $region17: #{tpu_custom_call.1} parent=1 // pred_fallthru
      _
    // Predicated region
    $region18: #{tpu_custom_call.1} parent=1 // pred_check
      _
    $region19: #{tpu_custom_call.1} parent=1 // pred_check_branch
      %41 = sbr.rel (0) target = $region21
    $region20: #{tpu_custom_call.1} parent=1 // pred_region
      %42 = dma.done [#allocation3], 8192
    $region21: #{tpu_custom_call.1} parent=1 // pred_fallthru
      _
    // Predicated region
    $region22: #{tpu_custom_call.1} parent=1 // pred_check
      _
    $region23: #{tpu_custom_call.1} parent=1 // pred_check_branch
      %44 = sbr.rel (0) target = $region25
    $region24: #{tpu_custom_call.1} parent=1 // pred_region
      %45 = dma.done [#allocation6], 1024
    $region25: #{tpu_custom_call.1} parent=1 // pred_fallthru
      _
    %v47 = vld [vmem:[#allocation2] sm:$0xff]
    %v48 = vld [vmem:[#allocation2 + $0x8] sm:$0xff]
    %v49 = vld [vmem:[#allocation2 + $0x10] sm:$0xff]
    %v50 = vld [vmem:[#allocation2 + $0x18] sm:$0xff]
    %v51 = vld [vmem:[#allocation2 + $0x20] sm:$0xff]
    %v52 = vld [vmem:[#allocation2 + $0x28] sm:$0xff]
    %v53 = vld [vmem:[#allocation2 + $0x30] sm:$0xff]
    %v54 = vld [vmem:[#allocation2 + $0x38] sm:$0xff]
    %v55 = vld [vmem:[#allocation2 + $0x40] sm:$0xff]
    %v56 = vld [vmem:[#allocation2 + $0x48] sm:$0xff]
    %v57 = vld [vmem:[#allocation2 + $0x50] sm:$0xff]
    %v58 = vld [vmem:[#allocation2 + $0x58] sm:$0xff]
    %v59 = vld [vmem:[#allocation2 + $0x60] sm:$0xff]
    %v60 = vld [vmem:[#allocation2 + $0x68] sm:$0xff]
    %v61 = vld [vmem:[#allocation2 + $0x70] sm:$0xff]
    %v62 = vld [vmem:[#allocation2 + $0x78] sm:$0xff]
    %v63 = vld [vmem:[#allocation2 + $0x80] sm:$0xff]
    %v64 = vld [vmem:[#allocation2 + $0x88] sm:$0xff]
    %v65 = vld [vmem:[#allocation2 + $0x90] sm:$0xff]
    %v66 = vld [vmem:[#allocation2 + $0x98] sm:$0xff]
    %v67 = vld [vmem:[#allocation2 + $0xa0] sm:$0xff]
    %v68 = vld [vmem:[#allocation2 + $0xa8] sm:$0xff]
    %v69 = vld [vmem:[#allocation2 + $0xb0] sm:$0xff]
    %v70 = vld [vmem:[#allocation2 + $0xb8] sm:$0xff]
    %v71 = vld [vmem:[#allocation2 + $0xc0] sm:$0xff]
    %v72 = vld [vmem:[#allocation2 + $0xc8] sm:$0xff]
    %v73 = vld [vmem:[#allocation2 + $0xd0] sm:$0xff]
    %v74 = vld [vmem:[#allocation2 + $0xd8] sm:$0xff]
    %v75 = vld [vmem:[#allocation2 + $0xe0] sm:$0xff]
    %v76 = vld [vmem:[#allocation2 + $0xe8] sm:$0xff]
    %v77 = vld [vmem:[#allocation2 + $0xf0] sm:$0xff]
    %v78 = vld [vmem:[#allocation2 + $0xf8] sm:$0xff]
    %v79 = vld [vmem:[#allocation2 + $0x100] sm:$0xff]
    %v80 = vld [vmem:[#allocation2 + $0x108] sm:$0xff]
    %v81 = vld [vmem:[#allocation2 + $0x110] sm:$0xff]
    %v82 = vld [vmem:[#allocation2 + $0x118] sm:$0xff]
    %v83 = vld [vmem:[#allocation2 + $0x120] sm:$0xff]
    %v84 = vld [vmem:[#allocation2 + $0x128] sm:$0xff]
    %v85 = vld [vmem:[#allocation2 + $0x130] sm:$0xff]
    %v86 = vld [vmem:[#allocation2 + $0x138] sm:$0xff]
    %v87 = vld [vmem:[#allocation2 + $0x140] sm:$0xff]
    %v88 = vld [vmem:[#allocation2 + $0x148] sm:$0xff]
    %v89 = vld [vmem:[#allocation2 + $0x150] sm:$0xff]
    %v90 = vld [vmem:[#allocation2 + $0x158] sm:$0xff]
    %v91 = vld [vmem:[#allocation2 + $0x160] sm:$0xff]
    %v92 = vld [vmem:[#allocation2 + $0x168] sm:$0xff]
    %v93 = vld [vmem:[#allocation2 + $0x170] sm:$0xff]
    %v94 = vld [vmem:[#allocation2 + $0x178] sm:$0xff]
    %v95 = vld [vmem:[#allocation2 + $0x180] sm:$0xff]
    %v96 = vld [vmem:[#allocation2 + $0x188] sm:$0xff]
    %v97 = vld [vmem:[#allocation2 + $0x190] sm:$0xff]
    %v98 = vld [vmem:[#allocation2 + $0x198] sm:$0xff]
    %v99 = vld [vmem:[#allocation2 + $0x1a0] sm:$0xff]
    %v100 = vld [vmem:[#allocation2 + $0x1a8] sm:$0xff]
    %v101 = vld [vmem:[#allocation2 + $0x1b0] sm:$0xff]
    %v102 = vld [vmem:[#allocation2 + $0x1b8] sm:$0xff]
    %v103 = vld [vmem:[#allocation2 + $0x1c0] sm:$0xff]
    %v104 = vld [vmem:[#allocation2 + $0x1c8] sm:$0xff]
    %v105 = vld [vmem:[#allocation2 + $0x1d0] sm:$0xff]
    %v106 = vld [vmem:[#allocation2 + $0x1d8] sm:$0xff]
    %v107 = vld [vmem:[#allocation2 + $0x1e0] sm:$0xff]
    %v108 = vld [vmem:[#allocation2 + $0x1e8] sm:$0xff]
    %v109 = vld [vmem:[#allocation2 + $0x1f0] sm:$0xff]
    %v110 = vld [vmem:[#allocation2 + $0x1f8] sm:$0xff]
    %v111 = vpack.c.bf16 %v48, %v47
    %v112 = vpack.c.bf16 %v50, %v49
    %v113 = vpack.c.bf16 %v52, %v51
    %v114 = vpack.c.bf16 %v54, %v53
    %v115 = vpack.c.bf16 %v56, %v55
    %v116 = vpack.c.bf16 %v58, %v57
    %v117 = vpack.c.bf16 %v60, %v59
    %v118 = vpack.c.bf16 %v62, %v61
    %v119 = vpack.c.bf16 %v64, %v63
    %v120 = vpack.c.bf16 %v66, %v65
    %v121 = vpack.c.bf16 %v68, %v67
    %v122 = vpack.c.bf16 %v70, %v69
    %v123 = vpack.c.bf16 %v72, %v71
    %v124 = vpack.c.bf16 %v74, %v73
    %v125 = vpack.c.bf16 %v76, %v75
    %v126 = vpack.c.bf16 %v78, %v77
    %v127 = vpack.c.bf16 %v80, %v79
    %v128 = vpack.c.bf16 %v82, %v81
    %v129 = vpack.c.bf16 %v84, %v83
    %v130 = vpack.c.bf16 %v86, %v85
    %v131 = vpack.c.bf16 %v88, %v87
    %v132 = vpack.c.bf16 %v90, %v89
    %v133 = vpack.c.bf16 %v92, %v91
    %v134 = vpack.c.bf16 %v94, %v93
    %v135 = vpack.c.bf16 %v96, %v95
    %v136 = vpack.c.bf16 %v98, %v97
    %v137 = vpack.c.bf16 %v100, %v99
    %v138 = vpack.c.bf16 %v102, %v101
    %v139 = vpack.c.bf16 %v104, %v103
    %v140 = vpack.c.bf16 %v106, %v105
    %v141 = vpack.c.bf16 %v108, %v107
    %v142 = vpack.c.bf16 %v110, %v109
    %v143 = vld [vmem:[#allocation5] sm:$0xf]
    %v144 = vld [vmem:[#allocation5 + $0x4] sm:$0xf]
    %v145 = vld [vmem:[#allocation5 + $0x8] sm:$0xf]
    %v146 = vld [vmem:[#allocation5 + $0xc] sm:$0xf]
    %v147 = vld [vmem:[#allocation5 + $0x10] sm:$0xf]
    %v148 = vld [vmem:[#allocation5 + $0x14] sm:$0xf]
    %v149 = vld [vmem:[#allocation5 + $0x18] sm:$0xf]
    %v150 = vld [vmem:[#allocation5 + $0x1c] sm:$0xf]
    %v151 = vld [vmem:[#allocation5 + $0x20] sm:$0xf]
    %v152 = vld [vmem:[#allocation5 + $0x24] sm:$0xf]
    %v153 = vld [vmem:[#allocation5 + $0x28] sm:$0xf]
    %v154 = vld [vmem:[#allocation5 + $0x2c] sm:$0xf]
    %v155 = vld [vmem:[#allocation5 + $0x30] sm:$0xf]
    %v156 = vld [vmem:[#allocation5 + $0x34] sm:$0xf]
    %v157 = vld [vmem:[#allocation5 + $0x38] sm:$0xf]
    %v158 = vld [vmem:[#allocation5 + $0x3c] sm:$0xf]
    %v175 = vunpack.c.l.b16 %v143
    %v176 = vunpack.c.l.b16 %v144
    %v177 = vunpack.c.l.b16 %v145
    %v178 = vunpack.c.l.b16 %v146
    %v179 = vunpack.c.l.b16 %v147
    %v180 = vunpack.c.l.b16 %v148
    %v181 = vunpack.c.l.b16 %v149
    %v182 = vunpack.c.l.b16 %v150
    %v183 = vunpack.c.l.b16 %v151
    %v184 = vunpack.c.l.b16 %v152
    %v185 = vunpack.c.l.b16 %v153
    %v186 = vunpack.c.l.b16 %v154
    %v187 = vunpack.c.l.b16 %v155
    %v188 = vunpack.c.l.b16 %v156
    %v189 = vunpack.c.l.b16 %v157
    %v190 = vunpack.c.l.b16 %v158
    %v191 = vpack.c.b16 %v176, %v175
    %v192 = vpack.c.b16 %v178, %v177
    %v193 = vpack.c.b16 %v180, %v179
    %v194 = vpack.c.b16 %v182, %v181
    %v195 = vpack.c.b16 %v184, %v183
    %v196 = vpack.c.b16 %v186, %v185
    %v197 = vpack.c.b16 %v188, %v187
    %v198 = vpack.c.b16 %v190, %v189
    %207 = vmatprep.subr.bf16.mxu0 0
    %208 = vmatpush1.bf16.msra.mxu0 %v191
    %209 = vmatprep.subr.bf16.mxu0 0
    %210 = vmatpush1.bf16.msra.mxu0 %v192
    %211 = vmatprep.subr.bf16.mxu0 0
    %212 = vmatpush1.bf16.msra.mxu0 %v193
    %213 = vmatprep.subr.bf16.mxu0 0
    %214 = vmatpush1.bf16.msra.mxu0 %v194
    %215 = vmatprep.subr.bf16.mxu0 0
    %216 = vmatpush1.bf16.msra.mxu0 %v195
    %217 = vmatprep.subr.bf16.mxu0 0
    %218 = vmatpush1.bf16.msra.mxu0 %v196
    %219 = vmatprep.subr.bf16.mxu0 0
    %220 = vmatpush1.bf16.msra.mxu0 %v197
    %221 = vmatprep.subr.bf16.mxu0 0
    %222 = vmatpush1.bf16.msra.mxu0 %v198
    %223 = vmatprep.subr.bf16.mxu0 0
    %224 = vmatpush1.bf16.msra.mxu0 0
    %225 = vmatprep.subr.bf16.mxu0 0
    %226 = vmatpush1.bf16.msra.mxu0 0
    %227 = vmatprep.subr.bf16.mxu0 0
    %228 = vmatpush1.bf16.msra.mxu0 0
    %229 = vmatprep.subr.bf16.mxu0 0
    %230 = vmatpush1.bf16.msra.mxu0 0
    %231 = vmatprep.subr.bf16.mxu0 0
    %232 = vmatpush1.bf16.msra.mxu0 0
    %233 = vmatprep.subr.bf16.mxu0 0
    %234 = vmatpush1.bf16.msra.mxu0 0
    %235 = vmatprep.subr.bf16.mxu0 0
    %236 = vmatpush1.bf16.msra.mxu0 0
    %237 = vmatprep.subr.bf16.mxu0 0
    %238 = vmatpush1.bf16.msra.mxu0 0
    %239 = vmatprep.mubr.bf16.mxu0 0
    %240 = vmatmul.mubr.bf16.gmra.mrb[0].mxu0 %v111
    %v241 = vpop.f32.mrb[0].mxu0
    %v242 = vadd.f32 0.0, %v241
    %v243 = vpop.f32.mrb[0].mxu0
    %v244 = vpop.f32.mrb[0].mxu0
    %v245 = vadd.f32 0.0, %v244
    %v246 = vpop.f32.mrb[0].mxu0
    %247 = vmatprep.mubr.bf16.mxu0 0
    %248 = vmatmul.mubr.bf16.gmra.mrb[0].mxu0 %v112
    %v249 = vpop.f32.mrb[0].mxu0
    %v250 = vadd.f32 0.0, %v249
    %v251 = vpop.f32.mrb[0].mxu0
    %v252 = vpop.f32.mrb[0].mxu0
    %v253 = vadd.f32 0.0, %v252
    %v254 = vpop.f32.mrb[0].mxu0
    %255 = vmatprep.mubr.bf16.mxu0 0
    %256 = vmatmul.mubr.bf16.gmra.mrb[0].mxu0 %v113
    %v257 = vpop.f32.mrb[0].mxu0
    %v258 = vadd.f32 0.0, %v257
    %v259 = vpop.f32.mrb[0].mxu0
    %v260 = vpop.f32.mrb[0].mxu0
    %v261 = vadd.f32 0.0, %v260
    %v262 = vpop.f32.mrb[0].mxu0
    %263 = vmatprep.mubr.bf16.mxu0 0
    %264 = vmatmul.mubr.bf16.gmra.mrb[0].mxu0 %v114
    %v265 = vpop.f32.mrb[0].mxu0
    %v266 = vadd.f32 0.0, %v265
    %v267 = vpop.f32.mrb[0].mxu0
    %v268 = vpop.f32.mrb[0].mxu0
    %v269 = vadd.f32 0.0, %v268
    %v270 = vpop.f32.mrb[0].mxu0
    %271 = vmatprep.mubr.bf16.mxu0 0
    %272 = vmatmul.mubr.bf16.gmra.mrb[0].mxu0 %v115
    %v273 = vpop.f32.mrb[0].mxu0
    %v274 = vadd.f32 0.0, %v273
    %v275 = vpop.f32.mrb[0].mxu0
    %v276 = vpop.f32.mrb[0].mxu0
    %v277 = vadd.f32 0.0, %v276
    %v278 = vpop.f32.mrb[0].mxu0
    %279 = vmatprep.mubr.bf16.mxu0 0
    %280 = vmatmul.mubr.bf16.gmra.mrb[0].mxu0 %v116
    %v281 = vpop.f32.mrb[0].mxu0
    %v282 = vadd.f32 0.0, %v281
    %v283 = vpop.f32.mrb[0].mxu0
    %v284 = vpop.f32.mrb[0].mxu0
    %v285 = vadd.f32 0.0, %v284
    %v286 = vpop.f32.mrb[0].mxu0
    %287 = vmatprep.mubr.bf16.mxu0 0
    %288 = vmatmul.mubr.bf16.gmra.mrb[0].mxu0 %v117
    %v289 = vpop.f32.mrb[0].mxu0
    %v290 = vadd.f32 0.0, %v289
    %v291 = vpop.f32.mrb[0].mxu0
    %v292 = vpop.f32.mrb[0].mxu0
    %v293 = vadd.f32 0.0, %v292
    %v294 = vpop.f32.mrb[0].mxu0
    %295 = vmatprep.mubr.bf16.mxu0 0
    %296 = vmatmul.mubr.bf16.gmra.mrb[0].mxu0 %v118
    %v297 = vpop.f32.mrb[0].mxu0
    %v298 = vadd.f32 0.0, %v297
    %v299 = vpop.f32.mrb[0].mxu0
    %v300 = vpop.f32.mrb[0].mxu0
    %v301 = vadd.f32 0.0, %v300
    %v302 = vpop.f32.mrb[0].mxu0
    %303 = vmatprep.mubr.bf16.mxu0 0
    %304 = vmatmul.mubr.bf16.gmra.mrb[0].mxu0 %v119
    %v305 = vpop.f32.mrb[0].mxu0
    %v306 = vadd.f32 0.0, %v305
    %v307 = vpop.f32.mrb[0].mxu0
    %v308 = vpop.f32.mrb[0].mxu0
    %v309 = vadd.f32 0.0, %v308
    %v310 = vpop.f32.mrb[0].mxu0
    %311 = vmatprep.mubr.bf16.mxu0 0
    %312 = vmatmul.mubr.bf16.gmra.mrb[0].mxu0 %v120
    %v313 = vpop.f32.mrb[0].mxu0
    %v314 = vadd.f32 0.0, %v313
    %v315 = vpop.f32.mrb[0].mxu0
    %v316 = vpop.f32.mrb[0].mxu0
    %v317 = vadd.f32 0.0, %v316
    %v318 = vpop.f32.mrb[0].mxu0
    %319 = vmatprep.mubr.bf16.mxu0 0
    %320 = vmatmul.mubr.bf16.gmra.mrb[0].mxu0 %v121
    %v321 = vpop.f32.mrb[0].mxu0
    %v322 = vadd.f32 0.0, %v321
    %v323 = vpop.f32.mrb[0].mxu0
    %v324 = vpop.f32.mrb[0].mxu0
    %v325 = vadd.f32 0.0, %v324
    %v326 = vpop.f32.mrb[0].mxu0
    %327 = vmatprep.mubr.bf16.mxu0 0
    %328 = vmatmul.mubr.bf16.gmra.mrb[0].mxu0 %v122
    %v329 = vpop.f32.mrb[0].mxu0
    %v330 = vadd.f32 0.0, %v329
    %v331 = vpop.f32.mrb[0].mxu0
    %v332 = vpop.f32.mrb[0].mxu0
    %v333 = vadd.f32 0.0, %v332
    %v334 = vpop.f32.mrb[0].mxu0
    %335 = vmatprep.mubr.bf16.mxu0 0
    %336 = vmatmul.mubr.bf16.gmra.mrb[0].mxu0 %v123
    %v337 = vpop.f32.mrb[0].mxu0
    %v338 = vadd.f32 0.0, %v337
    %v339 = vpop.f32.mrb[0].mxu0
    %v340 = vpop.f32.mrb[0].mxu0
    %v341 = vadd.f32 0.0, %v340
    %v342 = vpop.f32.mrb[0].mxu0
    %343 = vmatprep.mubr.bf16.mxu0 0
    %344 = vmatmul.mubr.bf16.gmra.mrb[0].mxu0 %v124
    %v345 = vpop.f32.mrb[0].mxu0
    %v346 = vadd.f32 0.0, %v345
    %v347 = vpop.f32.mrb[0].mxu0
    %v348 = vpop.f32.mrb[0].mxu0
    %v349 = vadd.f32 0.0, %v348
    %v350 = vpop.f32.mrb[0].mxu0
    %351 = vmatprep.mubr.bf16.mxu0 0
    %352 = vmatmul.mubr.bf16.gmra.mrb[0].mxu0 %v125
    %v353 = vpop.f32.mrb[0].mxu0
    %v354 = vadd.f32 0.0, %v353
    %v355 = vpop.f32.mrb[0].mxu0
    %v356 = vpop.f32.mrb[0].mxu0
    %v357 = vadd.f32 0.0, %v356
    %v358 = vpop.f32.mrb[0].mxu0
    %359 = vmatprep.mubr.bf16.mxu0 0
    %360 = vmatmul.mubr.bf16.gmra.mrb[0].mxu0 %v126
    %v361 = vpop.f32.mrb[0].mxu0
    %v362 = vadd.f32 0.0, %v361
    %v363 = vpop.f32.mrb[0].mxu0
    %v364 = vpop.f32.mrb[0].mxu0
    %v365 = vadd.f32 0.0, %v364
    %v366 = vpop.f32.mrb[0].mxu0
    %367 = vmatprep.mubr.bf16.mxu0 0
    %368 = vmatmul.mubr.bf16.gmra.mrb[0].mxu0 %v127
    %v369 = vpop.f32.mrb[0].mxu0
    %v370 = vadd.f32 0.0, %v369
    %v371 = vpop.f32.mrb[0].mxu0
    %v372 = vpop.f32.mrb[0].mxu0
    %v373 = vadd.f32 0.0, %v372
    %v374 = vpop.f32.mrb[0].mxu0
    %375 = vmatprep.mubr.bf16.mxu0 0
    %376 = vmatmul.mubr.bf16.gmra.mrb[0].mxu0 %v128
    %v377 = vpop.f32.mrb[0].mxu0
    %v378 = vadd.f32 0.0, %v377
    %v379 = vpop.f32.mrb[0].mxu0
    %v380 = vpop.f32.mrb[0].mxu0
    %v381 = vadd.f32 0.0, %v380
    %v382 = vpop.f32.mrb[0].mxu0
    %383 = vmatprep.mubr.bf16.mxu0 0
    %384 = vmatmul.mubr.bf16.gmra.mrb[0].mxu0 %v129
    %v385 = vpop.f32.mrb[0].mxu0
    %v386 = vadd.f32 0.0, %v385
    %v387 = vpop.f32.mrb[0].mxu0
    %v388 = vpop.f32.mrb[0].mxu0
    %v389 = vadd.f32 0.0, %v388
    %v390 = vpop.f32.mrb[0].mxu0
    %391 = vmatprep.mubr.bf16.mxu0 0
    %392 = vmatmul.mubr.bf16.gmra.mrb[0].mxu0 %v130
    %v393 = vpop.f32.mrb[0].mxu0
    %v394 = vadd.f32 0.0, %v393
    %v395 = vpop.f32.mrb[0].mxu0
    %v396 = vpop.f32.mrb[0].mxu0
    %v397 = vadd.f32 0.0, %v396
    %v398 = vpop.f32.mrb[0].mxu0
    %399 = vmatprep.mubr.bf16.mxu0 0
    %400 = vmatmul.mubr.bf16.gmra.mrb[0].mxu0 %v131
    %v401 = vpop.f32.mrb[0].mxu0
    %v402 = vadd.f32 0.0, %v401
    %v403 = vpop.f32.mrb[0].mxu0
    %v404 = vpop.f32.mrb[0].mxu0
    %v405 = vadd.f32 0.0, %v404
    %v406 = vpop.f32.mrb[0].mxu0
    %407 = vmatprep.mubr.bf16.mxu0 0
    %408 = vmatmul.mubr.bf16.gmra.mrb[0].mxu0 %v132
    %v409 = vpop.f32.mrb[0].mxu0
    %v410 = vadd.f32 0.0, %v409
    %v411 = vpop.f32.mrb[0].mxu0
    %v412 = vpop.f32.mrb[0].mxu0
    %v413 = vadd.f32 0.0, %v412
    %v414 = vpop.f32.mrb[0].mxu0
    %415 = vmatprep.mubr.bf16.mxu0 0
    %416 = vmatmul.mubr.bf16.gmra.mrb[0].mxu0 %v133
    %v417 = vpop.f32.mrb[0].mxu0
    %v418 = vadd.f32 0.0, %v417
    %v419 = vpop.f32.mrb[0].mxu0
    %v420 = vpop.f32.mrb[0].mxu0
    %v421 = vadd.f32 0.0, %v420
    %v422 = vpop.f32.mrb[0].mxu0
    %423 = vmatprep.mubr.bf16.mxu0 0
    %424 = vmatmul.mubr.bf16.gmra.mrb[0].mxu0 %v134
    %v425 = vpop.f32.mrb[0].mxu0
    %v426 = vadd.f32 0.0, %v425
    %v427 = vpop.f32.mrb[0].mxu0
    %v428 = vpop.f32.mrb[0].mxu0
    %v429 = vadd.f32 0.0, %v428
    %v430 = vpop.f32.mrb[0].mxu0
    %431 = vmatprep.mubr.bf16.mxu0 0
    %432 = vmatmul.mubr.bf16.gmra.mrb[0].mxu0 %v135
    %v433 = vpop.f32.mrb[0].mxu0
    %v434 = vadd.f32 0.0, %v433
    %v435 = vpop.f32.mrb[0].mxu0
    %v436 = vpop.f32.mrb[0].mxu0
    %v437 = vadd.f32 0.0, %v436
    %v438 = vpop.f32.mrb[0].mxu0
    %439 = vmatprep.mubr.bf16.mxu0 0
    %440 = vmatmul.mubr.bf16.gmra.mrb[0].mxu0 %v136
    %v441 = vpop.f32.mrb[0].mxu0
    %v442 = vadd.f32 0.0, %v441
    %v443 = vpop.f32.mrb[0].mxu0
    %v444 = vpop.f32.mrb[0].mxu0
    %v445 = vadd.f32 0.0, %v444
    %v446 = vpop.f32.mrb[0].mxu0
    %447 = vmatprep.mubr.bf16.mxu0 0
    %448 = vmatmul.mubr.bf16.gmra.mrb[0].mxu0 %v137
    %v449 = vpop.f32.mrb[0].mxu0
    %v450 = vadd.f32 0.0, %v449
    %v451 = vpop.f32.mrb[0].mxu0
    %v452 = vpop.f32.mrb[0].mxu0
    %v453 = vadd.f32 0.0, %v452
    %v454 = vpop.f32.mrb[0].mxu0
    %455 = vmatprep.mubr.bf16.mxu0 0
    %456 = vmatmul.mubr.bf16.gmra.mrb[0].mxu0 %v138
    %v457 = vpop.f32.mrb[0].mxu0
    %v458 = vadd.f32 0.0, %v457
    %v459 = vpop.f32.mrb[0].mxu0
    %v460 = vpop.f32.mrb[0].mxu0
    %v461 = vadd.f32 0.0, %v460
    %v462 = vpop.f32.mrb[0].mxu0
    %463 = vmatprep.mubr.bf16.mxu0 0
    %464 = vmatmul.mubr.bf16.gmra.mrb[0].mxu0 %v139
    %v465 = vpop.f32.mrb[0].mxu0
    %v466 = vadd.f32 0.0, %v465
    %v467 = vpop.f32.mrb[0].mxu0
    %v468 = vpop.f32.mrb[0].mxu0
    %v469 = vadd.f32 0.0, %v468
    %v470 = vpop.f32.mrb[0].mxu0
    %471 = vmatprep.mubr.bf16.mxu0 0
    %472 = vmatmul.mubr.bf16.gmra.mrb[0].mxu0 %v140
    %v473 = vpop.f32.mrb[0].mxu0
    %v474 = vadd.f32 0.0, %v473
    %v475 = vpop.f32.mrb[0].mxu0
    %v476 = vpop.f32.mrb[0].mxu0
    %v477 = vadd.f32 0.0, %v476
    %v478 = vpop.f32.mrb[0].mxu0
    %479 = vmatprep.mubr.bf16.mxu0 0
    %480 = vmatmul.mubr.bf16.gmra.mrb[0].mxu0 %v141
    %v481 = vpop.f32.mrb[0].mxu0
    %v482 = vadd.f32 0.0, %v481
    %v483 = vpop.f32.mrb[0].mxu0
    %v484 = vpop.f32.mrb[0].mxu0
    %v485 = vadd.f32 0.0, %v484
    %v486 = vpop.f32.mrb[0].mxu0
    %487 = vmatprep.mubr.bf16.mxu0 0
    %488 = vmatmul.mubr.bf16.gmra.mrb[0].mxu0 %v142
    %v489 = vpop.f32.mrb[0].mxu0
    %v490 = vadd.f32 0.0, %v489
    %v491 = vpop.f32.mrb[0].mxu0
    %v492 = vpop.f32.mrb[0].mxu0
    %v493 = vadd.f32 0.0, %v492
    %v494 = vpop.f32.mrb[0].mxu0
    %495 = vdwg.mxu0
    %v496 = vld [vmem:[%s2] sm:$0x1]
    %v498 = vlaneseq
    %v499 = vshrl.u32 %v498, 7
    %v500 = vsub.s32 0, %v499
    %v501 = vrot.slane %v496, %v500
    %v503 = vmul.f32 %v242, %v501
    %v504 = vmul.f32 %v245, %v501
    %v505 = vmul.f32 %v250, %v501
    %v506 = vmul.f32 %v253, %v501
    %v507 = vmul.f32 %v258, %v501
    %v508 = vmul.f32 %v261, %v501
    %v509 = vmul.f32 %v266, %v501
    %v510 = vmul.f32 %v269, %v501
    %v511 = vmul.f32 %v274, %v501
    %v512 = vmul.f32 %v277, %v501
    %v513 = vmul.f32 %v282, %v501
    %v514 = vmul.f32 %v285, %v501
    %v515 = vmul.f32 %v290, %v501
    %v516 = vmul.f32 %v293, %v501
    %v517 = vmul.f32 %v298, %v501
    %v518 = vmul.f32 %v301, %v501
    %v519 = vmul.f32 %v306, %v501
    %v520 = vmul.f32 %v309, %v501
    %v521 = vmul.f32 %v314, %v501
    %v522 = vmul.f32 %v317, %v501
    %v523 = vmul.f32 %v322, %v501
    %v524 = vmul.f32 %v325, %v501
    %v525 = vmul.f32 %v330, %v501
    %v526 = vmul.f32 %v333, %v501
    %v527 = vmul.f32 %v338, %v501
    %v528 = vmul.f32 %v341, %v501
    %v529 = vmul.f32 %v346, %v501
    %v530 = vmul.f32 %v349, %v501
    %v531 = vmul.f32 %v354, %v501
    %v532 = vmul.f32 %v357, %v501
    %v533 = vmul.f32 %v362, %v501
    %v534 = vmul.f32 %v365, %v501
    %v535 = vmul.f32 %v370, %v501
    %v536 = vmul.f32 %v373, %v501
    %v537 = vmul.f32 %v378, %v501
    %v538 = vmul.f32 %v381, %v501
    %v539 = vmul.f32 %v386, %v501
    %v540 = vmul.f32 %v389, %v501
    %v541 = vmul.f32 %v394, %v501
    %v542 = vmul.f32 %v397, %v501
    %v543 = vmul.f32 %v402, %v501
    %v544 = vmul.f32 %v405, %v501
    %v545 = vmul.f32 %v410, %v501
    %v546 = vmul.f32 %v413, %v501
    %v547 = vmul.f32 %v418, %v501
    %v548 = vmul.f32 %v421, %v501
    %v549 = vmul.f32 %v426, %v501
    %v550 = vmul.f32 %v429, %v501
    %v551 = vmul.f32 %v434, %v501
    %v552 = vmul.f32 %v437, %v501
    %v553 = vmul.f32 %v442, %v501
    %v554 = vmul.f32 %v445, %v501
    %v555 = vmul.f32 %v450, %v501
    %v556 = vmul.f32 %v453, %v501
    %v557 = vmul.f32 %v458, %v501
    %v558 = vmul.f32 %v461, %v501
    %v559 = vmul.f32 %v466, %v501
    %v560 = vmul.f32 %v469, %v501
    %v561 = vmul.f32 %v474, %v501
    %v562 = vmul.f32 %v477, %v501
    %v563 = vmul.f32 %v482, %v501
    %v564 = vmul.f32 %v485, %v501
    %v565 = vmul.f32 %v490, %v501
    %v566 = vmul.f32 %v493, %v501
    %v567 = vld [vmem:[%s3] sm:$0x1]
    %v569 = vlaneseq
    %v570 = vshrl.u32 %v569, 7
    %v571 = vsub.s32 0, %v570
    %v572 = vrot.slane %v567, %v571
    %v574 = vadd.f32 %v503, %v572
    %v575 = vadd.f32 %v504, %v572
    %v576 = vadd.f32 %v505, %v572
    %v577 = vadd.f32 %v506, %v572
    %v578 = vadd.f32 %v507, %v572
    %v579 = vadd.f32 %v508, %v572
    %v580 = vadd.f32 %v509, %v572
    %v581 = vadd.f32 %v510, %v572
    %v582 = vadd.f32 %v511, %v572
    %v583 = vadd.f32 %v512, %v572
    %v584 = vadd.f32 %v513, %v572
    %v585 = vadd.f32 %v514, %v572
    %v586 = vadd.f32 %v515, %v572
    %v587 = vadd.f32 %v516, %v572
    %v588 = vadd.f32 %v517, %v572
    %v589 = vadd.f32 %v518, %v572
    %v590 = vadd.f32 %v519, %v572
    %v591 = vadd.f32 %v520, %v572
    %v592 = vadd.f32 %v521, %v572
    %v593 = vadd.f32 %v522, %v572
    %v594 = vadd.f32 %v523, %v572
    %v595 = vadd.f32 %v524, %v572
    %v596 = vadd.f32 %v525, %v572
    %v597 = vadd.f32 %v526, %v572
    %v598 = vadd.f32 %v527, %v572
    %v599 = vadd.f32 %v528, %v572
    %v600 = vadd.f32 %v529, %v572
    %v601 = vadd.f32 %v530, %v572
    %v602 = vadd.f32 %v531, %v572
    %v603 = vadd.f32 %v532, %v572
    %v604 = vadd.f32 %v533, %v572
    %v605 = vadd.f32 %v534, %v572
    %v606 = vadd.f32 %v535, %v572
    %v607 = vadd.f32 %v536, %v572
    %v608 = vadd.f32 %v537, %v572
    %v609 = vadd.f32 %v538, %v572
    %v610 = vadd.f32 %v539, %v572
    %v611 = vadd.f32 %v540, %v572
    %v612 = vadd.f32 %v541, %v572
    %v613 = vadd.f32 %v542, %v572
    %v614 = vadd.f32 %v543, %v572
    %v615 = vadd.f32 %v544, %v572
    %v616 = vadd.f32 %v545, %v572
    %v617 = vadd.f32 %v546, %v572
    %v618 = vadd.f32 %v547, %v572
    %v619 = vadd.f32 %v548, %v572
    %v620 = vadd.f32 %v549, %v572
    %v621 = vadd.f32 %v550, %v572
    %v622 = vadd.f32 %v551, %v572
    %v623 = vadd.f32 %v552, %v572
    %v624 = vadd.f32 %v553, %v572
    %v625 = vadd.f32 %v554, %v572
    %v626 = vadd.f32 %v555, %v572
    %v627 = vadd.f32 %v556, %v572
    %v628 = vadd.f32 %v557, %v572
    %v629 = vadd.f32 %v558, %v572
    %v630 = vadd.f32 %v559, %v572
    %v631 = vadd.f32 %v560, %v572
    %v632 = vadd.f32 %v561, %v572
    %v633 = vadd.f32 %v562, %v572
    %v634 = vadd.f32 %v563, %v572
    %v635 = vadd.f32 %v564, %v572
    %v636 = vadd.f32 %v565, %v572
    %v637 = vadd.f32 %v566, %v572
    %v638 = vmul.f32 %v574, 0.5
    %v639 = vmul.f32 %v575, 0.5
    %v640 = vmul.f32 %v576, 0.5
    %v641 = vmul.f32 %v577, 0.5
    %v642 = vmul.f32 %v578, 0.5
    %v643 = vmul.f32 %v579, 0.5
    %v644 = vmul.f32 %v580, 0.5
    %v645 = vmul.f32 %v581, 0.5
    %v646 = vmul.f32 %v582, 0.5
    %v647 = vmul.f32 %v583, 0.5
    %v648 = vmul.f32 %v584, 0.5
    %v649 = vmul.f32 %v585, 0.5
    %v650 = vmul.f32 %v586, 0.5
    %v651 = vmul.f32 %v587, 0.5
    %v652 = vmul.f32 %v588, 0.5
    %v653 = vmul.f32 %v589, 0.5
    %v654 = vmul.f32 %v590, 0.5
    %v655 = vmul.f32 %v591, 0.5
    %v656 = vmul.f32 %v592, 0.5
    %v657 = vmul.f32 %v593, 0.5
    %v658 = vmul.f32 %v594, 0.5
    %v659 = vmul.f32 %v595, 0.5
    %v660 = vmul.f32 %v596, 0.5
    %v661 = vmul.f32 %v597, 0.5
    %v662 = vmul.f32 %v598, 0.5
    %v663 = vmul.f32 %v599, 0.5
    %v664 = vmul.f32 %v600, 0.5
    %v665 = vmul.f32 %v601, 0.5
    %v666 = vmul.f32 %v602, 0.5
    %v667 = vmul.f32 %v603, 0.5
    %v668 = vmul.f32 %v604, 0.5
    %v669 = vmul.f32 %v605, 0.5
    %v670 = vmul.f32 %v606, 0.5
    %v671 = vmul.f32 %v607, 0.5
    %v672 = vmul.f32 %v608, 0.5
    %v673 = vmul.f32 %v609, 0.5
    %v674 = vmul.f32 %v610, 0.5
    %v675 = vmul.f32 %v611, 0.5
    %v676 = vmul.f32 %v612, 0.5
    %v677 = vmul.f32 %v613, 0.5
    %v678 = vmul.f32 %v614, 0.5
    %v679 = vmul.f32 %v615, 0.5
    %v680 = vmul.f32 %v616, 0.5
    %v681 = vmul.f32 %v617, 0.5
    %v682 = vmul.f32 %v618, 0.5
    %v683 = vmul.f32 %v619, 0.5
    %v684 = vmul.f32 %v620, 0.5
    %v685 = vmul.f32 %v621, 0.5
    %v686 = vmul.f32 %v622, 0.5
    %v687 = vmul.f32 %v623, 0.5
    %v688 = vmul.f32 %v624, 0.5
    %v689 = vmul.f32 %v625, 0.5
    %v690 = vmul.f32 %v626, 0.5
    %v691 = vmul.f32 %v627, 0.5
    %v692 = vmul.f32 %v628, 0.5
    %v693 = vmul.f32 %v629, 0.5
    %v694 = vmul.f32 %v630, 0.5
    %v695 = vmul.f32 %v631, 0.5
    %v696 = vmul.f32 %v632, 0.5
    %v697 = vmul.f32 %v633, 0.5
    %v698 = vmul.f32 %v634, 0.5
    %v699 = vmul.f32 %v635, 0.5
    %v700 = vmul.f32 %v636, 0.5
    %v701 = vmul.f32 %v637, 0.5
    %v702 = vmul.f32 %v574, 0.70710677
    %v703 = vmul.f32 %v575, 0.70710677
    %v704 = vmul.f32 %v576, 0.70710677
    %v705 = vmul.f32 %v577, 0.70710677
    %v706 = vmul.f32 %v578, 0.70710677
    %v707 = vmul.f32 %v579, 0.70710677
    %v708 = vmul.f32 %v580, 0.70710677
    %v709 = vmul.f32 %v581, 0.70710677
    %v710 = vmul.f32 %v582, 0.70710677
    %v711 = vmul.f32 %v583, 0.70710677
    %v712 = vmul.f32 %v584, 0.70710677
    %v713 = vmul.f32 %v585, 0.70710677
    %v714 = vmul.f32 %v586, 0.70710677
    %v715 = vmul.f32 %v587, 0.70710677
    %v716 = vmul.f32 %v588, 0.70710677
    %v717 = vmul.f32 %v589, 0.70710677
    %v718 = vmul.f32 %v590, 0.70710677
    %v719 = vmul.f32 %v591, 0.70710677
    %v720 = vmul.f32 %v592, 0.70710677
    %v721 = vmul.f32 %v593, 0.70710677
    %v722 = vmul.f32 %v594, 0.70710677
    %v723 = vmul.f32 %v595, 0.70710677
    %v724 = vmul.f32 %v596, 0.70710677
    %v725 = vmul.f32 %v597, 0.70710677
    %v726 = vmul.f32 %v598, 0.70710677
    %v727 = vmul.f32 %v599, 0.70710677
    %v728 = vmul.f32 %v600, 0.70710677
    %v729 = vmul.f32 %v601, 0.70710677
    %v730 = vmul.f32 %v602, 0.70710677
    %v731 = vmul.f32 %v603, 0.70710677
    %v732 = vmul.f32 %v604, 0.70710677
    %v733 = vmul.f32 %v605, 0.70710677
    %v734 = vmul.f32 %v606, 0.70710677
    %v735 = vmul.f32 %v607, 0.70710677
    %v736 = vmul.f32 %v608, 0.70710677
    %v737 = vmul.f32 %v609, 0.70710677
    %v738 = vmul.f32 %v610, 0.70710677
    %v739 = vmul.f32 %v611, 0.70710677
    %v740 = vmul.f32 %v612, 0.70710677
    %v741 = vmul.f32 %v613, 0.70710677
    %v742 = vmul.f32 %v614, 0.70710677
    %v743 = vmul.f32 %v615, 0.70710677
    %v744 = vmul.f32 %v616, 0.70710677
    %v745 = vmul.f32 %v617, 0.70710677
    %v746 = vmul.f32 %v618, 0.70710677
    %v747 = vmul.f32 %v619, 0.70710677
    %v748 = vmul.f32 %v620, 0.70710677
    %v749 = vmul.f32 %v621, 0.70710677
    %v750 = vmul.f32 %v622, 0.70710677
    %v751 = vmul.f32 %v623, 0.70710677
    %v752 = vmul.f32 %v624, 0.70710677
    %v753 = vmul.f32 %v625, 0.70710677
    %v754 = vmul.f32 %v626, 0.70710677
    %v755 = vmul.f32 %v627, 0.70710677
    %v756 = vmul.f32 %v628, 0.70710677
    %v757 = vmul.f32 %v629, 0.70710677
    %v758 = vmul.f32 %v630, 0.70710677
    %v759 = vmul.f32 %v631, 0.70710677
    %v760 = vmul.f32 %v632, 0.70710677
    %v761 = vmul.f32 %v633, 0.70710677
    %v762 = vmul.f32 %v634, 0.70710677
    %v763 = vmul.f32 %v635, 0.70710677
    %v764 = vmul.f32 %v636, 0.70710677
    %v765 = vmul.f32 %v637, 0.70710677
    %v766 = verf.f32.pop %v702
    %v767 = verf.f32.pop %v703
    %v768 = verf.f32.pop %v704
    %v769 = verf.f32.pop %v705
    %v770 = verf.f32.pop %v706
    %v771 = verf.f32.pop %v707
    %v772 = verf.f32.pop %v708
    %v773 = verf.f32.pop %v709
    %v774 = verf.f32.pop %v710
    %v775 = verf.f32.pop %v711
    %v776 = verf.f32.pop %v712
    %v777 = verf.f32.pop %v713
    %v778 = verf.f32.pop %v714
    %v779 = verf.f32.pop %v715
    %v780 = verf.f32.pop %v716
    %v781 = verf.f32.pop %v717
    %v782 = verf.f32.pop %v718
    %v783 = verf.f32.pop %v719
    %v784 = verf.f32.pop %v720
    %v785 = verf.f32.pop %v721
    %v786 = verf.f32.pop %v722
    %v787 = verf.f32.pop %v723
    %v788 = verf.f32.pop %v724
    %v789 = verf.f32.pop %v725
    %v790 = verf.f32.pop %v726
    %v791 = verf.f32.pop %v727
    %v792 = verf.f32.pop %v728
    %v793 = verf.f32.pop %v729
    %v794 = verf.f32.pop %v730
    %v795 = verf.f32.pop %v731
    %v796 = verf.f32.pop %v732
    %v797 = verf.f32.pop %v733
    %v798 = verf.f32.pop %v734
    %v799 = verf.f32.pop %v735
    %v800 = verf.f32.pop %v736
    %v801 = verf.f32.pop %v737
    %v802 = verf.f32.pop %v738
    %v803 = verf.f32.pop %v739
    %v804 = verf.f32.pop %v740
    %v805 = verf.f32.pop %v741
    %v806 = verf.f32.pop %v742
    %v807 = verf.f32.pop %v743
    %v808 = verf.f32.pop %v744
    %v809 = verf.f32.pop %v745
    %v810 = verf.f32.pop %v746
    %v811 = verf.f32.pop %v747
    %v812 = verf.f32.pop %v748
    %v813 = verf.f32.pop %v749
    %v814 = verf.f32.pop %v750
    %v815 = verf.f32.pop %v751
    %v816 = verf.f32.pop %v752
    %v817 = verf.f32.pop %v753
    %v818 = verf.f32.pop %v754
    %v819 = verf.f32.pop %v755
    %v820 = verf.f32.pop %v756
    %v821 = verf.f32.pop %v757
    %v822 = verf.f32.pop %v758
    %v823 = verf.f32.pop %v759
    %v824 = verf.f32.pop %v760
    %v825 = verf.f32.pop %v761
    %v826 = verf.f32.pop %v762
    %v827 = verf.f32.pop %v763
    %v828 = verf.f32.pop %v764
    %v829 = verf.f32.pop %v765
    %v830 = vadd.f32 %v766, 1.0
    %v831 = vadd.f32 %v767, 1.0
    %v832 = vadd.f32 %v768, 1.0
    %v833 = vadd.f32 %v769, 1.0
    %v834 = vadd.f32 %v770, 1.0
    %v835 = vadd.f32 %v771, 1.0
    %v836 = vadd.f32 %v772, 1.0
    %v837 = vadd.f32 %v773, 1.0
    %v838 = vadd.f32 %v774, 1.0
    %v839 = vadd.f32 %v775, 1.0
    %v840 = vadd.f32 %v776, 1.0
    %v841 = vadd.f32 %v777, 1.0
    %v842 = vadd.f32 %v778, 1.0
    %v843 = vadd.f32 %v779, 1.0
    %v844 = vadd.f32 %v780, 1.0
    %v845 = vadd.f32 %v781, 1.0
    %v846 = vadd.f32 %v782, 1.0
    %v847 = vadd.f32 %v783, 1.0
    %v848 = vadd.f32 %v784, 1.0
    %v849 = vadd.f32 %v785, 1.0
    %v850 = vadd.f32 %v786, 1.0
    %v851 = vadd.f32 %v787, 1.0
    %v852 = vadd.f32 %v788, 1.0
    %v853 = vadd.f32 %v789, 1.0
    %v854 = vadd.f32 %v790, 1.0
    %v855 = vadd.f32 %v791, 1.0
    %v856 = vadd.f32 %v792, 1.0
    %v857 = vadd.f32 %v793, 1.0
    %v858 = vadd.f32 %v794, 1.0
    %v859 = vadd.f32 %v795, 1.0
    %v860 = vadd.f32 %v796, 1.0
    %v861 = vadd.f32 %v797, 1.0
    %v862 = vadd.f32 %v798, 1.0
    %v863 = vadd.f32 %v799, 1.0
    %v864 = vadd.f32 %v800, 1.0
    %v865 = vadd.f32 %v801, 1.0
    %v866 = vadd.f32 %v802, 1.0
    %v867 = vadd.f32 %v803, 1.0
    %v868 = vadd.f32 %v804, 1.0
    %v869 = vadd.f32 %v805, 1.0
    %v870 = vadd.f32 %v806, 1.0
    %v871 = vadd.f32 %v807, 1.0
    %v872 = vadd.f32 %v808, 1.0
    %v873 = vadd.f32 %v809, 1.0
    %v874 = vadd.f32 %v810, 1.0
    %v875 = vadd.f32 %v811, 1.0
    %v876 = vadd.f32 %v812, 1.0
    %v877 = vadd.f32 %v813, 1.0
    %v878 = vadd.f32 %v814, 1.0
    %v879 = vadd.f32 %v815, 1.0
    %v880 = vadd.f32 %v816, 1.0
    %v881 = vadd.f32 %v817, 1.0
    %v882 = vadd.f32 %v818, 1.0
    %v883 = vadd.f32 %v819, 1.0
    %v884 = vadd.f32 %v820, 1.0
    %v885 = vadd.f32 %v821, 1.0
    %v886 = vadd.f32 %v822, 1.0
    %v887 = vadd.f32 %v823, 1.0
    %v888 = vadd.f32 %v824, 1.0
    %v889 = vadd.f32 %v825, 1.0
    %v890 = vadd.f32 %v826, 1.0
    %v891 = vadd.f32 %v827, 1.0
    %v892 = vadd.f32 %v828, 1.0
    %v893 = vadd.f32 %v829, 1.0
    %v894 = vmul.f32 %v638, %v830
    %v895 = vmul.f32 %v639, %v831
    %v896 = vmul.f32 %v640, %v832
    %v897 = vmul.f32 %v641, %v833
    %v898 = vmul.f32 %v642, %v834
    %v899 = vmul.f32 %v643, %v835
    %v900 = vmul.f32 %v644, %v836
    %v901 = vmul.f32 %v645, %v837
    %v902 = vmul.f32 %v646, %v838
    %v903 = vmul.f32 %v647, %v839
    %v904 = vmul.f32 %v648, %v840
    %v905 = vmul.f32 %v649, %v841
    %v906 = vmul.f32 %v650, %v842
    %v907 = vmul.f32 %v651, %v843
    %v908 = vmul.f32 %v652, %v844
    %v909 = vmul.f32 %v653, %v845
    %v910 = vmul.f32 %v654, %v846
    %v911 = vmul.f32 %v655, %v847
    %v912 = vmul.f32 %v656, %v848
    %v913 = vmul.f32 %v657, %v849
    %v914 = vmul.f32 %v658, %v850
    %v915 = vmul.f32 %v659, %v851
    %v916 = vmul.f32 %v660, %v852
    %v917 = vmul.f32 %v661, %v853
    %v918 = vmul.f32 %v662, %v854
    %v919 = vmul.f32 %v663, %v855
    %v920 = vmul.f32 %v664, %v856
    %v921 = vmul.f32 %v665, %v857
    %v922 = vmul.f32 %v666, %v858
    %v923 = vmul.f32 %v667, %v859
    %v924 = vmul.f32 %v668, %v860
    %v925 = vmul.f32 %v669, %v861
    %v926 = vmul.f32 %v670, %v862
    %v927 = vmul.f32 %v671, %v863
    %v928 = vmul.f32 %v672, %v864
    %v929 = vmul.f32 %v673, %v865
    %v930 = vmul.f32 %v674, %v866
    %v931 = vmul.f32 %v675, %v867
    %v932 = vmul.f32 %v676, %v868
    %v933 = vmul.f32 %v677, %v869
    %v934 = vmul.f32 %v678, %v870
    %v935 = vmul.f32 %v679, %v871
    %v936 = vmul.f32 %v680, %v872
    %v937 = vmul.f32 %v681, %v873
    %v938 = vmul.f32 %v682, %v874
    %v939 = vmul.f32 %v683, %v875
    %v940 = vmul.f32 %v684, %v876
    %v941 = vmul.f32 %v685, %v877
    %v942 = vmul.f32 %v686, %v878
    %v943 = vmul.f32 %v687, %v879
    %v944 = vmul.f32 %v688, %v880
    %v945 = vmul.f32 %v689, %v881
    %v946 = vmul.f32 %v690, %v882
    %v947 = vmul.f32 %v691, %v883
    %v948 = vmul.f32 %v692, %v884
    %v949 = vmul.f32 %v693, %v885
    %v950 = vmul.f32 %v694, %v886
    %v951 = vmul.f32 %v695, %v887
    %v952 = vmul.f32 %v696, %v888
    %v953 = vmul.f32 %v697, %v889
    %v954 = vmul.f32 %v698, %v890
    %v955 = vmul.f32 %v699, %v891
    %v956 = vmul.f32 %v700, %v892
    %v957 = vmul.f32 %v701, %v893
    %958 = vst [vmem:[#allocation7] sm:$0xff] %v894
    %959 = vst [vmem:[#allocation7 + $0x8] sm:$0xff] %v895
    %960 = vst [vmem:[#allocation7 + $0x10] sm:$0xff] %v896
    %961 = vst [vmem:[#allocation7 + $0x18] sm:$0xff] %v897
    %962 = vst [vmem:[#allocation7 + $0x20] sm:$0xff] %v898
    %963 = vst [vmem:[#allocation7 + $0x28] sm:$0xff] %v899
    %964 = vst [vmem:[#allocation7 + $0x30] sm:$0xff] %v900
    %965 = vst [vmem:[#allocation7 + $0x38] sm:$0xff] %v901
    %966 = vst [vmem:[#allocation7 + $0x40] sm:$0xff] %v902
    %967 = vst [vmem:[#allocation7 + $0x48] sm:$0xff] %v903
    %968 = vst [vmem:[#allocation7 + $0x50] sm:$0xff] %v904
    %969 = vst [vmem:[#allocation7 + $0x58] sm:$0xff] %v905
    %970 = vst [vmem:[#allocation7 + $0x60] sm:$0xff] %v906
    %971 = vst [vmem:[#allocation7 + $0x68] sm:$0xff] %v907
    %972 = vst [vmem:[#allocation7 + $0x70] sm:$0xff] %v908
    %973 = vst [vmem:[#allocation7 + $0x78] sm:$0xff] %v909
    %974 = vst [vmem:[#allocation7 + $0x80] sm:$0xff] %v910
    %975 = vst [vmem:[#allocation7 + $0x88] sm:$0xff] %v911
    %976 = vst [vmem:[#allocation7 + $0x90] sm:$0xff] %v912
    %977 = vst [vmem:[#allocation7 + $0x98] sm:$0xff] %v913
    %978 = vst [vmem:[#allocation7 + $0xa0] sm:$0xff] %v914
    %979 = vst [vmem:[#allocation7 + $0xa8] sm:$0xff] %v915
    %980 = vst [vmem:[#allocation7 + $0xb0] sm:$0xff] %v916
    %981 = vst [vmem:[#allocation7 + $0xb8] sm:$0xff] %v917
    %982 = vst [vmem:[#allocation7 + $0xc0] sm:$0xff] %v918
    %983 = vst [vmem:[#allocation7 + $0xc8] sm:$0xff] %v919
    %984 = vst [vmem:[#allocation7 + $0xd0] sm:$0xff] %v920
    %985 = vst [vmem:[#allocation7 + $0xd8] sm:$0xff] %v921
    %986 = vst [vmem:[#allocation7 + $0xe0] sm:$0xff] %v922
    %987 = vst [vmem:[#allocation7 + $0xe8] sm:$0xff] %v923
    %988 = vst [vmem:[#allocation7 + $0xf0] sm:$0xff] %v924
    %989 = vst [vmem:[#allocation7 + $0xf8] sm:$0xff] %v925
    %990 = vst [vmem:[#allocation7 + $0x100] sm:$0xff] %v926
    %991 = vst [vmem:[#allocation7 + $0x108] sm:$0xff] %v927
    %992 = vst [vmem:[#allocation7 + $0x110] sm:$0xff] %v928
    %993 = vst [vmem:[#allocation7 + $0x118] sm:$0xff] %v929
    %994 = vst [vmem:[#allocation7 + $0x120] sm:$0xff] %v930
    %995 = vst [vmem:[#allocation7 + $0x128] sm:$0xff] %v931
    %996 = vst [vmem:[#allocation7 + $0x130] sm:$0xff] %v932
    %997 = vst [vmem:[#allocation7 + $0x138] sm:$0xff] %v933
    %998 = vst [vmem:[#allocation7 + $0x140] sm:$0xff] %v934
    %999 = vst [vmem:[#allocation7 + $0x148] sm:$0xff] %v935
    %1000 = vst [vmem:[#allocation7 + $0x150] sm:$0xff] %v936
    %1001 = vst [vmem:[#allocation7 + $0x158] sm:$0xff] %v937
    %1002 = vst [vmem:[#allocation7 + $0x160] sm:$0xff] %v938
    %1003 = vst [vmem:[#allocation7 + $0x168] sm:$0xff] %v939
    %1004 = vst [vmem:[#allocation7 + $0x170] sm:$0xff] %v940
    %1005 = vst [vmem:[#allocation7 + $0x178] sm:$0xff] %v941
    %1006 = vst [vmem:[#allocation7 + $0x180] sm:$0xff] %v942
    %1007 = vst [vmem:[#allocation7 + $0x188] sm:$0xff] %v943
    %1008 = vst [vmem:[#allocation7 + $0x190] sm:$0xff] %v944
    %1009 = vst [vmem:[#allocation7 + $0x198] sm:$0xff] %v945
    %1010 = vst [vmem:[#allocation7 + $0x1a0] sm:$0xff] %v946
    %1011 = vst [vmem:[#allocation7 + $0x1a8] sm:$0xff] %v947
    %1012 = vst [vmem:[#allocation7 + $0x1b0] sm:$0xff] %v948
    %1013 = vst [vmem:[#allocation7 + $0x1b8] sm:$0xff] %v949
    %1014 = vst [vmem:[#allocation7 + $0x1c0] sm:$0xff] %v950
    %1015 = vst [vmem:[#allocation7 + $0x1c8] sm:$0xff] %v951
    %1016 = vst [vmem:[#allocation7 + $0x1d0] sm:$0xff] %v952
    %1017 = vst [vmem:[#allocation7 + $0x1d8] sm:$0xff] %v953
    %1018 = vst [vmem:[#allocation7 + $0x1e0] sm:$0xff] %v954
    %1019 = vst [vmem:[#allocation7 + $0x1e8] sm:$0xff] %v955
    %1020 = vst [vmem:[#allocation7 + $0x1f0] sm:$0xff] %v956
    %1021 = vst [vmem:[#allocation7 + $0x1f8] sm:$0xff] %v957
    // Predicated region
    $region26: #{tpu_custom_call.1} parent=1 // pred_check
      _
    $region27: #{tpu_custom_call.1} parent=1 // pred_check_branch
      %1023 = sbr.rel (0) target = $region29
    $region28: #{tpu_custom_call.1} parent=1 // pred_region
      %s1025 = ssub.s32 8192, 8192
      %1026 = vsyncadd [#allocation4], %s1025
      %s1027 = sshll.u32 [#allocation7], 4
      %s1028 = int_to_ptr.vmem [resolvable:$true] %s1027
      %1033 = dma.vmem_to_hbm [thread:$0]  %s1028, 8192, %s4, [#allocation4], 128, 128, 8
    $region29: #{tpu_custom_call.1} parent=1 // pred_fallthru
      _
    // Predicated region
    $region30: #{tpu_custom_call.1} parent=1 // pred_check
      _
    $region31: #{tpu_custom_call.1} parent=1 // pred_check_branch
      %1035 = sbr.rel (0) target = $region33
    $region32: #{tpu_custom_call.1} parent=1 // pred_region
      %1036 = dma.done [#allocation4], 8192
    $region33: #{tpu_custom_call.1} parent=1 // pred_fallthru
      _
    %1037 = vsyncpa [#allocation3], 1
    %1038 = vsyncpa [#allocation6], 1
    %1039 = vsyncpa [#allocation4], 1

</llo_original>
